<compile_context>
chip_gen: v7x
topology: tpu7x:2x2x1
jax: 0.10.0
libtpu: 0.0.40
codegen_flags: <defaults>
</compile_context>

<pallas_src>
import jax
import jax.numpy as jnp
from jax.experimental import pallas as pl
from jax.experimental.pallas import tpu as pltpu

VOCAB = 128      # node / med vocabulary size
EMB_DIM = 64     # GCN embedding dim (repo default)
E_PAD = 128      # lane-padded embedding width (last dim of every tile)
ROW_BLK = 64     # output row block per grid point (2 grid points total)

# Packed-input slab layout (bf16, width E_PAD). Every section starts on a
# multiple of 16 sublanes, so static bf16 slices stay native-tile aligned.
_ADJ_OFF = 0                       # (VOCAB, VOCAB)      rows   0..128
_W1_OFF = _ADJ_OFF + VOCAB         # (VOCAB, E_PAD)      rows 128..256
_B1_OFF = _W1_OFF + VOCAB          # (1, E_PAD) in 16    rows 256..272
_W2_OFF = _B1_OFF + 16             # (E_PAD, E_PAD)      rows 272..400
_B2_OFF = _W2_OFF + E_PAD          # (1, E_PAD) in 16    rows 400..416
_SLAB_ROWS = _B2_OFF + 16          # 416


def _gcn_kernel(slab_ref, out_ref):
    i = pl.program_id(0)

    adj = slab_ref[_ADJ_OFF:_ADJ_OFF + VOCAB, :]                   # (V, V)      bf16
    w1 = slab_ref[_W1_OFF:_W1_OFF + VOCAB, :]                      # (V, E_PAD)  bf16
    b1 = slab_ref[_B1_OFF:_B1_OFF + 1, :].astype(jnp.float32)      # (1, E_PAD)  f32
    w2 = slab_ref[_W2_OFF:_W2_OFF + E_PAD, :]                      # (E_PAD, E_PAD) bf16
    b2 = slab_ref[_B2_OFF:_B2_OFF + 1, :].astype(jnp.float32)      # (1, E_PAD)  f32

    # Layer 1 (x = I folded away): h = ReLU(adj @ W1 + b1).
    # Computed redundantly per grid point; ~2 MFLOP, negligible vs. launch cost.
    h = jnp.dot(adj, w1, preferred_element_type=jnp.float32) + b1
    h = jnp.maximum(h, 0.0)                                        # f32 elementwise
    # TODO(synk): training-mode dropout (p=0.3) not modeled; eval semantics only.

    # Layer 2, row block i: out_rows = (adj_rows @ h) @ W2 + b2.
    row0 = pl.multiple_of(i * ROW_BLK, ROW_BLK)
    adj_rows = slab_ref[pl.ds(_ADJ_OFF + row0, ROW_BLK), :]        # (ROW_BLK, V) bf16
    t = jnp.dot(adj_rows, h.astype(jnp.bfloat16),
                preferred_element_type=jnp.float32)                # (ROW_BLK, E_PAD) f32
    out_ref[...] = jnp.dot(t.astype(jnp.bfloat16), w2,
                           preferred_element_type=jnp.float32) + b2


def gcn_pallas(slab):
    """slab: (SLAB_ROWS, E_PAD) bf16 packed [adj | W1 | b1 | W2 | b2]."""
    grid = (VOCAB // ROW_BLK,)     # (2,) -> both TensorCores on v7x
    flops_per_pt = 2 * (VOCAB * VOCAB * E_PAD            # layer 1 (redundant)
                        + ROW_BLK * VOCAB * E_PAD        # adj_rows @ h
                        + ROW_BLK * E_PAD * E_PAD)       # t @ W2
    bytes_accessed = (grid[0] * _SLAB_ROWS * E_PAD * 2   # bf16 slab per grid point
                      + VOCAB * E_PAD * 4)               # f32 output
    return pl.pallas_call(
        _gcn_kernel,
        out_shape=jax.ShapeDtypeStruct((VOCAB, E_PAD), jnp.float32),
        grid_spec=pltpu.PrefetchScalarGridSpec(
            num_scalar_prefetch=0,
            grid=grid,
            in_specs=[pl.BlockSpec((_SLAB_ROWS, E_PAD), lambda i: (0, 0))],
            out_specs=pl.BlockSpec((ROW_BLK, E_PAD), lambda i: (i, 0)),
        ),
        compiler_params=pltpu.CompilerParams(dimension_semantics=("parallel",)),
        cost_estimate=pl.CostEstimate(flops=grid[0] * flops_per_pt,
                                      transcendentals=0,
                                      bytes_accessed=bytes_accessed),
    )(slab)


# ----------------------------- host-side prep -------------------------------

def normalize_adj(adj):
    """Row-normalize(adj + I), mirroring GCN.normalize in the PyTorch module."""
    a = adj + jnp.eye(adj.shape[0], dtype=adj.dtype)
    rowsum = jnp.sum(a, axis=1)
    r_inv = jnp.where(rowsum > 0, 1.0 / rowsum, 0.0)               # inf -> 0 guard
    return r_inv[:, None] * a


def pack_inputs(adj_norm, params):
    """Pack adj_norm + W1/b1/W2/b2 into one lane-dense bf16 (416, 128) slab.

    Padded parameter columns/rows are zero, so the padded output lanes are
    exactly zero and the host-side [:, :EMB_DIM] slice is exact.
    """
    slab = jnp.zeros((_SLAB_ROWS, E_PAD), jnp.float32)
    slab = slab.at[_ADJ_OFF:_ADJ_OFF + VOCAB, :VOCAB].set(adj_norm)
    slab = slab.at[_W1_OFF:_W1_OFF + VOCAB, :EMB_DIM].set(params["w1"])
    slab = slab.at[_B1_OFF, :EMB_DIM].set(params["b1"])
    slab = slab.at[_W2_OFF:_W2_OFF + EMB_DIM, :EMB_DIM].set(params["w2"])
    slab = slab.at[_B2_OFF, :EMB_DIM].set(params["b2"])
    return slab.astype(jnp.bfloat16)


def init_params(key):
    """GraphConvolution.reset_parameters style: uniform(-1/sqrt(out), 1/sqrt(out))."""
    ks = jax.random.split(key, 4)
    s = 1.0 / (EMB_DIM ** 0.5)
    return {
        "w1": jax.random.uniform(ks[0], (VOCAB, EMB_DIM), jnp.float32, -s, s),
        "b1": jax.random.uniform(ks[1], (EMB_DIM,), jnp.float32, -s, s),
        "w2": jax.random.uniform(ks[2], (EMB_DIM, EMB_DIM), jnp.float32, -s, s),
        "b2": jax.random.uniform(ks[3], (EMB_DIM,), jnp.float32, -s, s),
    }


def gcn_reference_f32(adj_norm, params):
    """Pure-f32 JAX reference mirroring the PyTorch forward (eval mode)."""
    x = jnp.eye(VOCAB, dtype=jnp.float32)
    h = adj_norm @ (x @ params["w1"]) + params["b1"]
    h = jnp.maximum(h, 0.0)                                        # dropout identity in eval
    return adj_norm @ (h @ params["w2"]) + params["b2"]


def gcn_reference_mixed(adj_norm, params):
    """Pure-JAX reference mirroring the kernel's bf16-input / f32-accum math."""
    bf = jnp.bfloat16
    adj_b = adj_norm.astype(bf)
    w1_b, w2_b = params["w1"].astype(bf), params["w2"].astype(bf)
    b1 = params["b1"].astype(bf).astype(jnp.float32)
    b2 = params["b2"].astype(bf).astype(jnp.float32)
    h = jnp.maximum(jnp.dot(adj_b, w1_b, preferred_element_type=jnp.float32) + b1, 0.0)
    t = jnp.dot(adj_b, h.astype(bf), preferred_element_type=jnp.float32)
    return jnp.dot(t.astype(bf), w2_b, preferred_element_type=jnp.float32) + b2


if __name__ == "__main__":
    key = jax.random.PRNGKey(0)
    k_adj, k_par = jax.random.split(key)

    # deterministic symmetric 0/1 adjacency (self-loops added by normalize_adj)
    a = (jax.random.uniform(k_adj, (VOCAB, VOCAB)) < 0.05).astype(jnp.float32)
    adj = jnp.clip(a + a.T, 0.0, 1.0) * (1.0 - jnp.eye(VOCAB, dtype=jnp.float32))

    params = init_params(k_par)
    adj_norm = normalize_adj(adj)
    slab = pack_inputs(adj_norm, params)

    out_padded = gcn_pallas(slab)
    out_padded = jax.block_until_ready(out_padded)
    out = out_padded[:, :EMB_DIM]                                  # drop zero lanes

    ref_mixed = gcn_reference_mixed(adj_norm, params)
    ref_f32 = gcn_reference_f32(adj_norm, params)
    assert out.shape == (VOCAB, EMB_DIM)
    assert jnp.allclose(out, ref_mixed, atol=1e-3, rtol=1e-3), \
        "mismatch vs. mixed-precision (bf16-input) reference"
    assert jnp.allclose(out, ref_f32, atol=2e-2, rtol=2e-2), \
        "mismatch vs. full-f32 PyTorch-equivalent reference"

    print("KERNEL_OK")
</pallas_src>

<mosaic_0001>
module attributes {stable_mosaic.version = 11 : i64} {
  func.func @_gcn_kernel(%arg0: i32, %arg1: memref<416x128xbf16, #tpu.memory_space<vmem>>, %arg2: memref<64x128xf32, #tpu.memory_space<vmem>>) attributes {dimension_semantics = [#tpu.dimension_semantics<parallel>], iteration_bounds = array<i64: 2>, scalar_prefetch = 0 : i64, scratch_operands = 0 : i64, tpu.core_type = #tpu.core_type<tc>, window_params = [{pipeline_mode = #tpu.pipeline_mode<synchronous>, transform_indices = @transform_0, window_bounds = array<i64: 416, 128>}, {transform_indices = @transform_1, window_bounds = array<i64: 64, 128>}]} {
    %c0 = arith.constant 0 : index
    %c0_0 = arith.constant 0 : index
    %0 = vector.load %arg1[%c0, %c0_0] : memref<416x128xbf16, #tpu.memory_space<vmem>>, vector<128x128xbf16>
    %c128 = arith.constant 128 : index
    %c0_1 = arith.constant 0 : index
    %1 = vector.load %arg1[%c128, %c0_1] : memref<416x128xbf16, #tpu.memory_space<vmem>>, vector<128x128xbf16>
    %c256 = arith.constant 256 : index
    %c0_2 = arith.constant 0 : index
    %2 = vector.load %arg1[%c256, %c0_2] : memref<416x128xbf16, #tpu.memory_space<vmem>>, vector<1x128xbf16>
    %3 = arith.extf %2 : vector<1x128xbf16> to vector<1x128xf32>
    %c272 = arith.constant 272 : index
    %c0_3 = arith.constant 0 : index
    %4 = vector.load %arg1[%c272, %c0_3] : memref<416x128xbf16, #tpu.memory_space<vmem>>, vector<128x128xbf16>
    %c400 = arith.constant 400 : index
    %c0_4 = arith.constant 0 : index
    %5 = vector.load %arg1[%c400, %c0_4] : memref<416x128xbf16, #tpu.memory_space<vmem>>, vector<1x128xbf16>
    %6 = arith.extf %5 : vector<1x128xbf16> to vector<1x128xf32>
    %cst = arith.constant dense<0.000000e+00> : vector<128x128xf32>
    %7 = tpu.matmul %0, %1, %cst {dimension_numbers = #tpu.dot_dimension_numbers<[1], [0], [0], [1], [0, 0, 1, 1], [], []>} : vector<128x128xbf16>, vector<128x128xbf16>, vector<128x128xf32> -> vector<128x128xf32>
    %8 = vector.broadcast %3 : vector<1x128xf32> to vector<128x128xf32>
    %9 = arith.addf %7, %8 : vector<128x128xf32>
    %cst_5 = arith.constant 0.000000e+00 : f32
    %10 = vector.broadcast %cst_5 : f32 to vector<128x128xf32>
    %11 = arith.maximumf %9, %10 : vector<128x128xf32>
    %c64_i32 = arith.constant 64 : i32
    %12 = arith.muli %arg0, %c64_i32 : i32
    %13 = tpu.assume_multiple %12, 64 : i32
    %c0_i32 = arith.constant 0 : i32
    %14 = arith.addi %c0_i32, %13 : i32
    %15 = arith.index_cast %14 : i32 to index
    %c0_6 = arith.constant 0 : index
    %16 = vector.load %arg1[%15, %c0_6] : memref<416x128xbf16, #tpu.memory_space<vmem>>, vector<64x128xbf16>
    %17 = arith.truncf %11 : vector<128x128xf32> to vector<128x128xbf16>
    %cst_7 = arith.constant dense<0.000000e+00> : vector<64x128xf32>
    %18 = tpu.matmul %16, %17, %cst_7 {dimension_numbers = #tpu.dot_dimension_numbers<[1], [0], [0], [1], [0, 0, 1, 1], [], []>} : vector<64x128xbf16>, vector<128x128xbf16>, vector<64x128xf32> -> vector<64x128xf32>
    %19 = arith.truncf %18 : vector<64x128xf32> to vector<64x128xbf16>
    %cst_8 = arith.constant dense<0.000000e+00> : vector<64x128xf32>
    %20 = tpu.matmul %19, %4, %cst_8 {dimension_numbers = #tpu.dot_dimension_numbers<[1], [0], [0], [1], [0, 0, 1, 1], [], []>} : vector<64x128xbf16>, vector<128x128xbf16>, vector<64x128xf32> -> vector<64x128xf32>
    %21 = vector.broadcast %6 : vector<1x128xf32> to vector<64x128xf32>
    %22 = arith.addf %20, %21 : vector<64x128xf32>
    %c0_9 = arith.constant 0 : index
    %c0_10 = arith.constant 0 : index
    %23 = vector.load %arg2[%c0_9, %c0_10] : memref<64x128xf32, #tpu.memory_space<vmem>>, vector<64x128xf32>
    tpu.vector_store %arg2[%c0_9, %c0_10], %22 {strides = array<i32>} : memref<64x128xf32, #tpu.memory_space<vmem>>, vector<64x128xf32>,
    return
  }
  func.func @transform_0(%arg0: i32) -> (i32, i32) {
    %c0_i32 = arith.constant 0 : i32
    %c0_i32_0 = arith.constant 0 : i32
    %c0_i32_1 = arith.constant 0 : i32
    return %c0_i32, %c0_i32_0 : i32, i32
  }
  func.func @transform_1(%arg0: i32) -> (i32, i32) {
    %c0_i32 = arith.constant 0 : i32
    %c0_i32_0 = arith.constant 0 : i32
    return %arg0, %c0_i32 : i32, i32
  }
}

</mosaic_0001>

<llo_original>
// kernel: tpu_custom_call.1
$region0: #{tpu_custom_call.1}
  #allocation0 [shape = 'u32[]', space=smem, size = 0x4, offset = 0x4, fixed_abs, tag = 'smem constant byte address 0x4 - core index']
  #allocation1 [shape = 'u32[144,128]{1,0:T(1,128)}', space=vmem, size = 0x12000, scoped, tag = 'internal scratch']
  %s0 = inlined_call_operand.hbm [shape: bf16[416,128], index: 0, kind: input, shape index: {}]
  %s1 = inlined_call_operand.hbm [shape: f32[128,128], index: 1, kind: output, shape index: {}]
  %s2 = sld [smem:[#allocation0]]
  $region41: #{tpu_custom_call.1} parent=0
    _
  %s4 = ssub.s32 1, %s2
  %s5 = scalar_select 0, %s4, %s2
  $region1: #{tpu_custom_call.1} parent=0
    #allocation2 [shape = 'u8[106496]{0}', space=vmem, size = 0x1a000, scoped, tag = 'input window, operand 0, single buffered']
    #allocation3 [shape = 's32[2]{0}', space=sflag, size = 0x8, scoped, tag = 'scoped memory for tpu_custom_call.1']
    #allocation4 [shape = 's32[2]{0}', space=sflag, size = 0x8, scoped, tag = 'scoped memory for tpu_custom_call.1']
    #allocation5 [shape = 'u8[65536]{0}', space=vmem, size = 0x10000, scoped, tag = 'output window, operand 0']
    %6 = vsyncpa [#allocation3], 0
    %7 = vsyncpa [#allocation4], 0
    %s8 = scalar_lea.sflag [#allocation4], 1
    %9 = vsyncpa %s8, 0
    loop: start=0, step=1, limit=4
    $region2: #{tpu_custom_call.1} parent=1 // loop_pre_header
      _
    $region3: #{tpu_custom_call.1} parent=1 // loop_header
      %s11 = sphi 0, %s15
      %p12 = scmp.ge.s32.totalorder %s11, 4
      %s19 = sphi 0, %s19
      %s21 = sphi 0, %s19
      %s22 = sphi 0, %s21
      %s36 = sphi 0, %s22
      %s42 = sphi 0, %s44
      %s45 = sphi 0, %s42
      %s46 = sphi 0, %s45
      %s62 = sphi 0, %s46
    $region4: #{tpu_custom_call.1} parent=1 // loop_header_branch
      %14 = sbr.rel (%p12) target = $region8
    $region5: #{tpu_custom_call.1} parent=1 // loop_body
      %s16 = ssub.s32 %s11, 1
      %s17 = ssub.s32 %s11, 2
      %s18 = sadd.s32 %s11, 1
      %s20 = sadd.s32 %s19, 1
      %p23 = scmp.eq.s32.totalorder %s11, 1
      %p24 = scmp.ne.s32.totalorder %s19, %s21
      %p25 = scmp.eq.s32.totalorder %s11, 0
      %p26 = por %p24, %p25
      %p27 = scmp.ne.s32.totalorder %s19, %s21
      %p28 = scmp.eq.s32.totalorder %s16, 1
      %p29 = por %p27, %p28
      %p30 = scmp.ne.s32.totalorder %s21, %s22
      %p31 = scmp.eq.s32.totalorder %s16, 0
      %p32 = por %p30, %p31
      %p33 = scmp.ne.s32.totalorder %s21, %s22
      %p34 = scmp.eq.s32.totalorder %s17, 1
      %p35 = por %p33, %p34
      %p37 = scmp.ne.s32.totalorder %s22, %s36
      %p38 = scmp.eq.s32.totalorder %s17, 0
      %p39 = por %p37, %p38
      %s40 = ssub.s32 %s11, %s18
      %p41 = scmp.eq.s32.totalorder %s40, 0
      %s43 = sadd.s32 %s42, 1
      %s44 = scalar_select %p41, %s42, %s43
      %p47 = pneg %p41
      %p48 = scmp.eq.s32.totalorder %s11, 1
      %p49 = por %p47, %p48
      %p50 = scmp.ne.s32.totalorder %s42, %s45
      %p51 = scmp.eq.s32.totalorder %s11, 0
      %p52 = por %p50, %p51
      %p53 = scmp.ne.s32.totalorder %s42, %s45
      %p54 = scmp.eq.s32.totalorder %s16, 1
      %p55 = por %p53, %p54
      %p56 = scmp.ne.s32.totalorder %s45, %s46
      %p57 = scmp.eq.s32.totalorder %s16, 0
      %p58 = por %p56, %p57
      %p59 = scmp.ne.s32.totalorder %s45, %s46
      %p60 = scmp.eq.s32.totalorder %s17, 1
      %p61 = por %p59, %p60
      %p63 = scmp.ne.s32.totalorder %s46, %s62
      %p64 = scmp.eq.s32.totalorder %s17, 0
      %p65 = por %p63, %p64
      %p66 = scmp.le.s32.totalorder 1, %s11
      %p67 = scmp.lt.s32.totalorder %s11, 3
      %p68 = pnand %p66, %p67
      %p69 = pneg %p68
      // Predicated region
      $region9: #{tpu_custom_call.1} parent=5 // pred_check
        _
      $region10: #{tpu_custom_call.1} parent=5 // pred_check_branch
        %71 = sbr.rel (%p68) target = $region12
      $region11: #{tpu_custom_call.1} parent=5 // pred_region
        %s72 = ssub.s32 %s11, 1
        // Predicated region
        $region13: #{tpu_custom_call.1} parent=11 // pred_check
          %p73 = pneg %p32
        $region14: #{tpu_custom_call.1} parent=11 // pred_check_branch
          %75 = sbr.rel (%p73) target = $region16
        $region15: #{tpu_custom_call.1} parent=11 // pred_region
          %s77 = ssub.s32 3328, 3328
          %78 = vsyncadd [#allocation3], %s77
          %s79 = sshll.u32 [#allocation2], 4
          %s80 = int_to_ptr.vmem [resolvable:$true] %s79
          %85 = dma.hbm_to_vmem [thread:$0]  %s0, 3328, %s80, [#allocation3], 64, 64, 4
        $region16: #{tpu_custom_call.1} parent=11 // pred_fallthru
          _
      $region12: #{tpu_custom_call.1} parent=5 // pred_fallthru
        _
      %p86 = scmp.lt.s32.totalorder %s11, 2
      // Predicated region
      $region17: #{tpu_custom_call.1} parent=5 // pred_check
        %p87 = pneg %p86
      $region18: #{tpu_custom_call.1} parent=5 // pred_check_branch
        %89 = sbr.rel (%p87) target = $region20
      $region19: #{tpu_custom_call.1} parent=5 // pred_region
        _
      $region20: #{tpu_custom_call.1} parent=5 // pred_fallthru
        _
      %p90 = scmp.le.s32.totalorder 1, %s11
      %p91 = scmp.lt.s32.totalorder %s11, 3
      %p92 = pnand %p90, %p91
      %p93 = pneg %p92
      // Predicated region
      $region21: #{tpu_custom_call.1} parent=5 // pred_check
        _
      $region22: #{tpu_custom_call.1} parent=5 // pred_check_branch
        %95 = sbr.rel (%p92) target = $region24
      $region23: #{tpu_custom_call.1} parent=5 // pred_region
        %s96 = ssub.s32 %s11, 1
        // Predicated region
        $region25: #{tpu_custom_call.1} parent=23 // pred_check
          %p97 = pneg %p32
        $region26: #{tpu_custom_call.1} parent=23 // pred_check_branch
          %99 = sbr.rel (%p97) target = $region28
        $region27: #{tpu_custom_call.1} parent=23 // pred_region
          %100 = dma.done [#allocation3], 3328
        $region28: #{tpu_custom_call.1} parent=23 // pred_fallthru
          _
        %p101 = pneg %p32
        %p102 = pneg %p29
        %p103 = pneg %p58
        %p104 = pneg %p55
        %s105 = sand.u32 %s45, 1
        %s106 = scalar_lea.sflag [#allocation4], %s105
        %s107 = sand.u32 %s45, 1
        %s108 = smul.addr %s107, 64
        %s109 = scalar_lea.vmem [#allocation5], %s108
        %s110 = smul.u32 8, %s16
        %v112 = vld [vmem:[#allocation2] sm:$0xf]
        %v113 = vld [vmem:[#allocation2 + $0x4] sm:$0xf]
        %v114 = vld [vmem:[#allocation2 + $0x8] sm:$0xf]
        %v115 = vld [vmem:[#allocation2 + $0xc] sm:$0xf]
        %v116 = vld [vmem:[#allocation2 + $0x10] sm:$0xf]
        %v117 = vld [vmem:[#allocation2 + $0x14] sm:$0xf]
        %v118 = vld [vmem:[#allocation2 + $0x18] sm:$0xf]
        %v119 = vld [vmem:[#allocation2 + $0x1c] sm:$0xf]
        %v120 = vld [vmem:[#allocation2 + $0x20] sm:$0xf]
        %v121 = vld [vmem:[#allocation2 + $0x24] sm:$0xf]
        %v122 = vld [vmem:[#allocation2 + $0x28] sm:$0xf]
        %v123 = vld [vmem:[#allocation2 + $0x2c] sm:$0xf]
        %v124 = vld [vmem:[#allocation2 + $0x30] sm:$0xf]
        %v125 = vld [vmem:[#allocation2 + $0x34] sm:$0xf]
        %v126 = vld [vmem:[#allocation2 + $0x38] sm:$0xf]
        %v127 = vld [vmem:[#allocation2 + $0x3c] sm:$0xf]
        %v128 = vld [vmem:[#allocation2 + $0x40] sm:$0xf]
        %v129 = vld [vmem:[#allocation2 + $0x44] sm:$0xf]
        %v130 = vld [vmem:[#allocation2 + $0x48] sm:$0xf]
        %v131 = vld [vmem:[#allocation2 + $0x4c] sm:$0xf]
        %v132 = vld [vmem:[#allocation2 + $0x50] sm:$0xf]
        %v133 = vld [vmem:[#allocation2 + $0x54] sm:$0xf]
        %v134 = vld [vmem:[#allocation2 + $0x58] sm:$0xf]
        %v135 = vld [vmem:[#allocation2 + $0x5c] sm:$0xf]
        %v136 = vld [vmem:[#allocation2 + $0x60] sm:$0xf]
        %v137 = vld [vmem:[#allocation2 + $0x64] sm:$0xf]
        %v138 = vld [vmem:[#allocation2 + $0x68] sm:$0xf]
        %v139 = vld [vmem:[#allocation2 + $0x6c] sm:$0xf]
        %v140 = vld [vmem:[#allocation2 + $0x70] sm:$0xf]
        %v141 = vld [vmem:[#allocation2 + $0x74] sm:$0xf]
        %v142 = vld [vmem:[#allocation2 + $0x78] sm:$0xf]
        %v143 = vld [vmem:[#allocation2 + $0x7c] sm:$0xf]
        %v144 = vld [vmem:[#allocation2 + $0x80] sm:$0x1]
        %v145 = vunpack.c.l.bf16 %v144
        %v146 = vld [vmem:[#allocation2 + $0x88] sm:$0xf]
        %v147 = vld [vmem:[#allocation2 + $0x8c] sm:$0xf]
        %v148 = vld [vmem:[#allocation2 + $0x90] sm:$0xf]
        %v149 = vld [vmem:[#allocation2 + $0x94] sm:$0xf]
        %v150 = vld [vmem:[#allocation2 + $0x98] sm:$0xf]
        %v151 = vld [vmem:[#allocation2 + $0x9c] sm:$0xf]
        %v152 = vld [vmem:[#allocation2 + $0xa0] sm:$0xf]
        %v153 = vld [vmem:[#allocation2 + $0xa4] sm:$0xf]
        %v154 = vld [vmem:[#allocation2 + $0xa8] sm:$0xf]
        %v155 = vld [vmem:[#allocation2 + $0xac] sm:$0xf]
        %v156 = vld [vmem:[#allocation2 + $0xb0] sm:$0xf]
        %v157 = vld [vmem:[#allocation2 + $0xb4] sm:$0xf]
        %v158 = vld [vmem:[#allocation2 + $0xb8] sm:$0xf]
        %v159 = vld [vmem:[#allocation2 + $0xbc] sm:$0xf]
        %v160 = vld [vmem:[#allocation2 + $0xc0] sm:$0xf]
        %v161 = vld [vmem:[#allocation2 + $0xc4] sm:$0xf]
        %v162 = vld [vmem:[#allocation2 + $0xc8] sm:$0x1]
        %v163 = vunpack.c.l.bf16 %v162
        %v164 = vlaneseq
        %v165 = vshrl.u32 %v164, 7
        %v166 = vsub.s32 0, %v165
        %v167 = vrot.slane %v145, %v166
        %v184 = vunpack.c.l.b16 %v112
        %v185 = vunpack.c.l.b16 %v113
        %v186 = vunpack.c.l.b16 %v114
        %v187 = vunpack.c.l.b16 %v115
        %v188 = vunpack.c.l.b16 %v116
        %v189 = vunpack.c.l.b16 %v117
        %v190 = vunpack.c.l.b16 %v118
        %v191 = vunpack.c.l.b16 %v119
        %v192 = vunpack.c.l.b16 %v120
        %v193 = vunpack.c.l.b16 %v121
        %v194 = vunpack.c.l.b16 %v122
        %v195 = vunpack.c.l.b16 %v123
        %v196 = vunpack.c.l.b16 %v124
        %v197 = vunpack.c.l.b16 %v125
        %v198 = vunpack.c.l.b16 %v126
        %v199 = vunpack.c.l.b16 %v127
        %v200 = vpack.c.b16 %v185, %v184
        %v201 = vpack.c.b16 %v187, %v186
        %v202 = vpack.c.b16 %v189, %v188
        %v203 = vpack.c.b16 %v191, %v190
        %v204 = vpack.c.b16 %v193, %v192
        %v205 = vpack.c.b16 %v195, %v194
        %v206 = vpack.c.b16 %v197, %v196
        %v207 = vpack.c.b16 %v199, %v198
        %v232 = vunpack.c.l.b16 %v128
        %v233 = vunpack.c.l.b16 %v129
        %v234 = vunpack.c.l.b16 %v130
        %v235 = vunpack.c.l.b16 %v131
        %v236 = vunpack.c.l.b16 %v132
        %v237 = vunpack.c.l.b16 %v133
        %v238 = vunpack.c.l.b16 %v134
        %v239 = vunpack.c.l.b16 %v135
        %v240 = vunpack.c.l.b16 %v136
        %v241 = vunpack.c.l.b16 %v137
        %v242 = vunpack.c.l.b16 %v138
        %v243 = vunpack.c.l.b16 %v139
        %v244 = vunpack.c.l.b16 %v140
        %v245 = vunpack.c.l.b16 %v141
        %v246 = vunpack.c.l.b16 %v142
        %v247 = vunpack.c.l.b16 %v143
        %v248 = vpack.c.b16 %v233, %v232
        %v249 = vpack.c.b16 %v235, %v234
        %v250 = vpack.c.b16 %v237, %v236
        %v251 = vpack.c.b16 %v239, %v238
        %v252 = vpack.c.b16 %v241, %v240
        %v253 = vpack.c.b16 %v243, %v242
        %v254 = vpack.c.b16 %v245, %v244
        %v255 = vpack.c.b16 %v247, %v246
        %264 = vmatprep.subr.bf16.mxu0 0
        %265 = vmatpush1.bf16.msra.mxu0 %v248
        %266 = vmatprep.subr.bf16.mxu0 0
        %267 = vmatpush1.bf16.msra.mxu0 %v249
        %268 = vmatprep.subr.bf16.mxu0 0
        %269 = vmatpush1.bf16.msra.mxu0 %v250
        %270 = vmatprep.subr.bf16.mxu0 0
        %271 = vmatpush1.bf16.msra.mxu0 %v251
        %272 = vmatprep.subr.bf16.mxu0 0
        %273 = vmatpush1.bf16.msra.mxu0 %v252
        %274 = vmatprep.subr.bf16.mxu0 0
        %275 = vmatpush1.bf16.msra.mxu0 %v253
        %276 = vmatprep.subr.bf16.mxu0 0
        %277 = vmatpush1.bf16.msra.mxu0 %v254
        %278 = vmatprep.subr.bf16.mxu0 0
        %279 = vmatpush1.bf16.msra.mxu0 %v255
        %280 = vmatprep.subr.bf16.mxu0 0
        %281 = vmatpush1.bf16.msra.mxu0 0
        %282 = vmatprep.subr.bf16.mxu0 0
        %283 = vmatpush1.bf16.msra.mxu0 0
        %284 = vmatprep.subr.bf16.mxu0 0
        %285 = vmatpush1.bf16.msra.mxu0 0
        %286 = vmatprep.subr.bf16.mxu0 0
        %287 = vmatpush1.bf16.msra.mxu0 0
        %288 = vmatprep.subr.bf16.mxu0 0
        %289 = vmatpush1.bf16.msra.mxu0 0
        %290 = vmatprep.subr.bf16.mxu0 0
        %291 = vmatpush1.bf16.msra.mxu0 0
        %292 = vmatprep.subr.bf16.mxu0 0
        %293 = vmatpush1.bf16.msra.mxu0 0
        %294 = vmatprep.subr.bf16.mxu0 0
        %295 = vmatpush1.bf16.msra.mxu0 0
        %296 = vmatprep.mubr.bf16.mxu0 0
        %297 = vmatmul.mubr.bf16.gmra.mrb[0].mxu0 %v200
        %v298 = vpop.f32.mrb[0].mxu0
        %v299 = vadd.f32 %v167, %v298
        %v300 = vpop.f32.mrb[0].mxu0
        %v301 = vpop.f32.mrb[0].mxu0
        %v302 = vadd.f32 %v167, %v301
        %v303 = vpop.f32.mrb[0].mxu0
        %304 = vmatprep.mubr.bf16.mxu0 0
        %305 = vmatmul.mubr.bf16.gmra.mrb[0].mxu0 %v201
        %v306 = vpop.f32.mrb[0].mxu0
        %v307 = vadd.f32 %v167, %v306
        %v308 = vpop.f32.mrb[0].mxu0
        %v309 = vpop.f32.mrb[0].mxu0
        %v310 = vadd.f32 %v167, %v309
        %v311 = vpop.f32.mrb[0].mxu0
        %312 = vmatprep.mubr.bf16.mxu0 0
        %313 = vmatmul.mubr.bf16.gmra.mrb[0].mxu0 %v202
        %v314 = vpop.f32.mrb[0].mxu0
        %v315 = vadd.f32 %v167, %v314
        %v316 = vpop.f32.mrb[0].mxu0
        %v317 = vpop.f32.mrb[0].mxu0
        %v318 = vadd.f32 %v167, %v317
        %v319 = vpop.f32.mrb[0].mxu0
        %320 = vmatprep.mubr.bf16.mxu0 0
        %321 = vmatmul.mubr.bf16.gmra.mrb[0].mxu0 %v203
        %v322 = vpop.f32.mrb[0].mxu0
        %v323 = vadd.f32 %v167, %v322
        %v324 = vpop.f32.mrb[0].mxu0
        %v325 = vpop.f32.mrb[0].mxu0
        %v326 = vadd.f32 %v167, %v325
        %v327 = vpop.f32.mrb[0].mxu0
        %328 = vmatprep.mubr.bf16.mxu0 0
        %329 = vmatmul.mubr.bf16.gmra.mrb[0].mxu0 %v204
        %v330 = vpop.f32.mrb[0].mxu0
        %v331 = vadd.f32 %v167, %v330
        %v332 = vpop.f32.mrb[0].mxu0
        %v333 = vpop.f32.mrb[0].mxu0
        %v334 = vadd.f32 %v167, %v333
        %v335 = vpop.f32.mrb[0].mxu0
        %336 = vmatprep.mubr.bf16.mxu0 0
        %337 = vmatmul.mubr.bf16.gmra.mrb[0].mxu0 %v205
        %v338 = vpop.f32.mrb[0].mxu0
        %v339 = vadd.f32 %v167, %v338
        %v340 = vpop.f32.mrb[0].mxu0
        %v341 = vpop.f32.mrb[0].mxu0
        %v342 = vadd.f32 %v167, %v341
        %v343 = vpop.f32.mrb[0].mxu0
        %344 = vmatprep.mubr.bf16.mxu0 0
        %345 = vmatmul.mubr.bf16.gmra.mrb[0].mxu0 %v206
        %v346 = vpop.f32.mrb[0].mxu0
        %v347 = vadd.f32 %v167, %v346
        %v348 = vpop.f32.mrb[0].mxu0
        %v349 = vpop.f32.mrb[0].mxu0
        %v350 = vadd.f32 %v167, %v349
        %v351 = vpop.f32.mrb[0].mxu0
        %352 = vmatprep.mubr.bf16.mxu0 0
        %353 = vmatmul.mubr.bf16.gmra.mrb[0].mxu0 %v207
        %v354 = vpop.f32.mrb[0].mxu0
        %v355 = vadd.f32 %v167, %v354
        %v356 = vpop.f32.mrb[0].mxu0
        %v357 = vpop.f32.mrb[0].mxu0
        %v358 = vadd.f32 %v167, %v357
        %v359 = vpop.f32.mrb[0].mxu0
        %360 = vdwg.mxu0
        %v361 = vmax.f32 %v299, 0.0
        %v362 = vmax.f32 %v302, 0.0
        %v363 = vmax.f32 %v307, 0.0
        %v364 = vmax.f32 %v310, 0.0
        %v365 = vmax.f32 %v315, 0.0
        %v366 = vmax.f32 %v318, 0.0
        %v367 = vmax.f32 %v323, 0.0
        %v368 = vmax.f32 %v326, 0.0
        %v369 = vmax.f32 %v331, 0.0
        %v370 = vmax.f32 %v334, 0.0
        %v371 = vmax.f32 %v339, 0.0
        %v372 = vmax.f32 %v342, 0.0
        %v373 = vmax.f32 %v347, 0.0
        %v374 = vmax.f32 %v350, 0.0
        %v375 = vmax.f32 %v355, 0.0
        %v376 = vmax.f32 %v358, 0.0
        %s377 = smul.u32 %s16, 64
        %s378 = sshra.s32 %s377, 3
        %s379 = sand.u32 %s377, 7
        %s380 = smul.addr %s378, 4
        %s381 = scalar_lea.vmem [#allocation2], %s380
        %v382 = vld [vmem:[%s381] sm:$0xf]
        %v383 = vld [vmem:[%s381 + $0x4] sm:$0xf]
        %v384 = vld [vmem:[%s381 + $0x8] sm:$0xf]
        %v385 = vld [vmem:[%s381 + $0xc] sm:$0xf]
        %v386 = vld [vmem:[%s381 + $0x10] sm:$0xf]
        %v387 = vld [vmem:[%s381 + $0x14] sm:$0xf]
        %v388 = vld [vmem:[%s381 + $0x18] sm:$0xf]
        %v389 = vld [vmem:[%s381 + $0x1c] sm:$0xf]
        %v390 = vpack.c.bf16 %v362, %v361
        %v391 = vpack.c.bf16 %v364, %v363
        %v392 = vpack.c.bf16 %v366, %v365
        %v393 = vpack.c.bf16 %v368, %v367
        %v394 = vpack.c.bf16 %v370, %v369
        %v395 = vpack.c.bf16 %v372, %v371
        %v396 = vpack.c.bf16 %v374, %v373
        %v397 = vpack.c.bf16 %v376, %v375
        %v406 = vunpack.c.l.b16 %v382
        %v407 = vunpack.c.l.b16 %v383
        %v408 = vunpack.c.l.b16 %v384
        %v409 = vunpack.c.l.b16 %v385
        %v410 = vunpack.c.l.b16 %v386
        %v411 = vunpack.c.l.b16 %v387
        %v412 = vunpack.c.l.b16 %v388
        %v413 = vunpack.c.l.b16 %v389
        %v414 = vpack.c.b16 %v407, %v406
        %v415 = vpack.c.b16 %v409, %v408
        %v416 = vpack.c.b16 %v411, %v410
        %v417 = vpack.c.b16 %v413, %v412
        %422 = vmatprep.subr.bf16.mxu0 0
        %423 = vmatpush1.bf16.msra.mxu0 %v390
        %424 = vmatprep.subr.bf16.mxu0 0
        %425 = vmatpush1.bf16.msra.mxu0 %v391
        %426 = vmatprep.subr.bf16.mxu0 0
        %427 = vmatpush1.bf16.msra.mxu0 %v392
        %428 = vmatprep.subr.bf16.mxu0 0
        %429 = vmatpush1.bf16.msra.mxu0 %v393
        %430 = vmatprep.subr.bf16.mxu0 0
        %431 = vmatpush1.bf16.msra.mxu0 %v394
        %432 = vmatprep.subr.bf16.mxu0 0
        %433 = vmatpush1.bf16.msra.mxu0 %v395
        %434 = vmatprep.subr.bf16.mxu0 0
        %435 = vmatpush1.bf16.msra.mxu0 %v396
        %436 = vmatprep.subr.bf16.mxu0 0
        %437 = vmatpush1.bf16.msra.mxu0 %v397
        %438 = vmatprep.subr.bf16.mxu0 0
        %439 = vmatpush1.bf16.msra.mxu0 0
        %440 = vmatprep.subr.bf16.mxu0 0
        %441 = vmatpush1.bf16.msra.mxu0 0
        %442 = vmatprep.subr.bf16.mxu0 0
        %443 = vmatpush1.bf16.msra.mxu0 0
        %444 = vmatprep.subr.bf16.mxu0 0
        %445 = vmatpush1.bf16.msra.mxu0 0
        %446 = vmatprep.subr.bf16.mxu0 0
        %447 = vmatpush1.bf16.msra.mxu0 0
        %448 = vmatprep.subr.bf16.mxu0 0
        %449 = vmatpush1.bf16.msra.mxu0 0
        %450 = vmatprep.subr.bf16.mxu0 0
        %451 = vmatpush1.bf16.msra.mxu0 0
        %452 = vmatprep.subr.bf16.mxu0 0
        %453 = vmatpush1.bf16.msra.mxu0 0
        %454 = vmatprep.mubr.bf16.mxu0 0
        %455 = vmatmul.mubr.bf16.gmra.mrb[0].mxu0 %v414
        %v456 = vpop.f32.mrb[0].mxu0
        %v457 = vadd.f32 0.0, %v456
        %v458 = vpop.f32.mrb[0].mxu0
        %v459 = vpop.f32.mrb[0].mxu0
        %v460 = vadd.f32 0.0, %v459
        %v461 = vpop.f32.mrb[0].mxu0
        %462 = vmatprep.mubr.bf16.mxu0 0
        %463 = vmatmul.mubr.bf16.gmra.mrb[0].mxu0 %v415
        %v464 = vpop.f32.mrb[0].mxu0
        %v465 = vadd.f32 0.0, %v464
        %v466 = vpop.f32.mrb[0].mxu0
        %v467 = vpop.f32.mrb[0].mxu0
        %v468 = vadd.f32 0.0, %v467
        %v469 = vpop.f32.mrb[0].mxu0
        %470 = vmatprep.mubr.bf16.mxu0 0
        %471 = vmatmul.mubr.bf16.gmra.mrb[0].mxu0 %v416
        %v472 = vpop.f32.mrb[0].mxu0
        %v473 = vadd.f32 0.0, %v472
        %v474 = vpop.f32.mrb[0].mxu0
        %v475 = vpop.f32.mrb[0].mxu0
        %v476 = vadd.f32 0.0, %v475
        %v477 = vpop.f32.mrb[0].mxu0
        %478 = vmatprep.mubr.bf16.mxu0 0
        %479 = vmatmul.mubr.bf16.gmra.mrb[0].mxu0 %v417
        %v480 = vpop.f32.mrb[0].mxu0
        %v481 = vadd.f32 0.0, %v480
        %v482 = vpop.f32.mrb[0].mxu0
        %v483 = vpop.f32.mrb[0].mxu0
        %v484 = vadd.f32 0.0, %v483
        %v485 = vpop.f32.mrb[0].mxu0
        %486 = vdwg.mxu0
        %v487 = vpack.c.bf16 %v460, %v457
        %v488 = vpack.c.bf16 %v468, %v465
        %v489 = vpack.c.bf16 %v476, %v473
        %v490 = vpack.c.bf16 %v484, %v481
        %v491 = vlaneseq
        %v492 = vshrl.u32 %v491, 7
        %v493 = vsub.s32 0, %v492
        %v494 = vrot.slane %v163, %v493
        %v511 = vunpack.c.l.b16 %v146
        %v512 = vunpack.c.l.b16 %v147
        %v513 = vunpack.c.l.b16 %v148
        %v514 = vunpack.c.l.b16 %v149
        %v515 = vunpack.c.l.b16 %v150
        %v516 = vunpack.c.l.b16 %v151
        %v517 = vunpack.c.l.b16 %v152
        %v518 = vunpack.c.l.b16 %v153
        %v519 = vunpack.c.l.b16 %v154
        %v520 = vunpack.c.l.b16 %v155
        %v521 = vunpack.c.l.b16 %v156
        %v522 = vunpack.c.l.b16 %v157
        %v523 = vunpack.c.l.b16 %v158
        %v524 = vunpack.c.l.b16 %v159
        %v525 = vunpack.c.l.b16 %v160
        %v526 = vunpack.c.l.b16 %v161
        %v527 = vpack.c.b16 %v512, %v511
        %v528 = vpack.c.b16 %v514, %v513
        %v529 = vpack.c.b16 %v516, %v515
        %v530 = vpack.c.b16 %v518, %v517
        %v531 = vpack.c.b16 %v520, %v519
        %v532 = vpack.c.b16 %v522, %v521
        %v533 = vpack.c.b16 %v524, %v523
        %v534 = vpack.c.b16 %v526, %v525
        %543 = vmatprep.subr.bf16.mxu0 0
        %544 = vmatpush1.bf16.msra.mxu0 %v527
        %545 = vmatprep.subr.bf16.mxu0 0
        %546 = vmatpush1.bf16.msra.mxu0 %v528
        %547 = vmatprep.subr.bf16.mxu0 0
        %548 = vmatpush1.bf16.msra.mxu0 %v529
        %549 = vmatprep.subr.bf16.mxu0 0
        %550 = vmatpush1.bf16.msra.mxu0 %v530
        %551 = vmatprep.subr.bf16.mxu0 0
        %552 = vmatpush1.bf16.msra.mxu0 %v531
        %553 = vmatprep.subr.bf16.mxu0 0
        %554 = vmatpush1.bf16.msra.mxu0 %v532
        %555 = vmatprep.subr.bf16.mxu0 0
        %556 = vmatpush1.bf16.msra.mxu0 %v533
        %557 = vmatprep.subr.bf16.mxu0 0
        %558 = vmatpush1.bf16.msra.mxu0 %v534
        %559 = vmatprep.subr.bf16.mxu0 0
        %560 = vmatpush1.bf16.msra.mxu0 0
        %561 = vmatprep.subr.bf16.mxu0 0
        %562 = vmatpush1.bf16.msra.mxu0 0
        %563 = vmatprep.subr.bf16.mxu0 0
        %564 = vmatpush1.bf16.msra.mxu0 0
        %565 = vmatprep.subr.bf16.mxu0 0
        %566 = vmatpush1.bf16.msra.mxu0 0
        %567 = vmatprep.subr.bf16.mxu0 0
        %568 = vmatpush1.bf16.msra.mxu0 0
        %569 = vmatprep.subr.bf16.mxu0 0
        %570 = vmatpush1.bf16.msra.mxu0 0
        %571 = vmatprep.subr.bf16.mxu0 0
        %572 = vmatpush1.bf16.msra.mxu0 0
        %573 = vmatprep.subr.bf16.mxu0 0
        %574 = vmatpush1.bf16.msra.mxu0 0
        %575 = vmatprep.mubr.bf16.mxu0 0
        %576 = vmatmul.mubr.bf16.gmra.mrb[0].mxu0 %v487
        %v577 = vpop.f32.mrb[0].mxu0
        %v578 = vadd.f32 %v494, %v577
        %v579 = vpop.f32.mrb[0].mxu0
        %v580 = vpop.f32.mrb[0].mxu0
        %v581 = vadd.f32 %v494, %v580
        %v582 = vpop.f32.mrb[0].mxu0
        %583 = vmatprep.mubr.bf16.mxu0 0
        %584 = vmatmul.mubr.bf16.gmra.mrb[0].mxu0 %v488
        %v585 = vpop.f32.mrb[0].mxu0
        %v586 = vadd.f32 %v494, %v585
        %v587 = vpop.f32.mrb[0].mxu0
        %v588 = vpop.f32.mrb[0].mxu0
        %v589 = vadd.f32 %v494, %v588
        %v590 = vpop.f32.mrb[0].mxu0
        %591 = vmatprep.mubr.bf16.mxu0 0
        %592 = vmatmul.mubr.bf16.gmra.mrb[0].mxu0 %v489
        %v593 = vpop.f32.mrb[0].mxu0
        %v594 = vadd.f32 %v494, %v593
        %v595 = vpop.f32.mrb[0].mxu0
        %v596 = vpop.f32.mrb[0].mxu0
        %v597 = vadd.f32 %v494, %v596
        %v598 = vpop.f32.mrb[0].mxu0
        %599 = vmatprep.mubr.bf16.mxu0 0
        %600 = vmatmul.mubr.bf16.gmra.mrb[0].mxu0 %v490
        %v601 = vpop.f32.mrb[0].mxu0
        %v602 = vadd.f32 %v494, %v601
        %v603 = vpop.f32.mrb[0].mxu0
        %v604 = vpop.f32.mrb[0].mxu0
        %v605 = vadd.f32 %v494, %v604
        %v606 = vpop.f32.mrb[0].mxu0
        %607 = vdwg.mxu0
        %608 = vst [vmem:[%s109] sm:$0xff] %v578
        %609 = vst [vmem:[%s109 + $0x8] sm:$0xff] %v581
        %610 = vst [vmem:[%s109 + $0x10] sm:$0xff] %v586
        %611 = vst [vmem:[%s109 + $0x18] sm:$0xff] %v589
        %612 = vst [vmem:[%s109 + $0x20] sm:$0xff] %v594
        %613 = vst [vmem:[%s109 + $0x28] sm:$0xff] %v597
        %614 = vst [vmem:[%s109 + $0x30] sm:$0xff] %v602
        %615 = vst [vmem:[%s109 + $0x38] sm:$0xff] %v605
        %s616 = sand.u32 %s45, 1
        %s617 = scalar_lea.sflag [#allocation4], %s616
        %s618 = sand.u32 %s45, 1
        %s619 = smul.addr %s618, 64
        %s620 = scalar_lea.vmem [#allocation5], %s619
        // Predicated region
        $region29: #{tpu_custom_call.1} parent=23 // pred_check
          %p621 = pneg %p55
        $region30: #{tpu_custom_call.1} parent=23 // pred_check_branch
          %623 = sbr.rel (%p621) target = $region32
        $region31: #{tpu_custom_call.1} parent=23 // pred_region
          %s624 = smul.u32 8, %s16
          %s626 = ssub.s32 1024, 1024
          %627 = vsyncadd %s617, %s626
          %s628 = smul.addr %s624, 128
          %s629 = scalar_lea.hbm %s1, %s628
          %s630 = sshll.u32 %s620, 4
          %s631 = int_to_ptr.vmem [resolvable:$true] %s630
          %636 = dma.vmem_to_hbm [thread:$0]  %s631, 1024, %s629, %s617, 128, 128, 8
        $region32: #{tpu_custom_call.1} parent=23 // pred_fallthru
          _
      $region24: #{tpu_custom_call.1} parent=5 // pred_fallthru
        _
      %p637 = scmp.le.s32.totalorder 2, %s11
      // Predicated region
      $region33: #{tpu_custom_call.1} parent=5 // pred_check
        %p638 = pneg %p637
      $region34: #{tpu_custom_call.1} parent=5 // pred_check_branch
        %640 = sbr.rel (%p638) target = $region36
      $region35: #{tpu_custom_call.1} parent=5 // pred_region
        %s641 = ssub.s32 %s11, 2
        // Predicated region
        $region37: #{tpu_custom_call.1} parent=35 // pred_check
          %p642 = pneg %p61
        $region38: #{tpu_custom_call.1} parent=35 // pred_check_branch
          %644 = sbr.rel (%p642) target = $region40
        $region39: #{tpu_custom_call.1} parent=35 // pred_region
          %s645 = sand.u32 %s46, 1
          %s646 = scalar_lea.sflag [#allocation4], %s645
          %s647 = sand.u32 %s46, 1
          %s648 = smul.addr %s647, 64
          %s649 = scalar_lea.vmem [#allocation5], %s648
          %650 = dma.done %s646, 1024
        $region40: #{tpu_custom_call.1} parent=35 // pred_fallthru
          _
      $region36: #{tpu_custom_call.1} parent=5 // pred_fallthru
        _
    $region6: #{tpu_custom_call.1} parent=1 // loop_footer
      %s15 = sadd.s32 1, %s11
    $region7: #{tpu_custom_call.1} parent=1 // loop_footer_branch
      %10 = sbr.rel target = $region3
    $region8: #{tpu_custom_call.1} parent=1 // loop_exit
      _
    %651 = vsyncpa [#allocation3], 1
    %s652 = scalar_lea.sflag [#allocation3], 1
    %653 = vsyncpa %s652, 1
    %654 = vsyncpa [#allocation4], 1
    %s655 = scalar_lea.sflag [#allocation4], 1
    %656 = vsyncpa %s655, 1

</llo_original>
